<compile_context>
chip_gen: v5e
topology: v5e:2x2
jax: 0.10.0
libtpu: 0.0.40
codegen_flags: <defaults>
</compile_context>

<pallas_src>
import functools

import numpy as np
import jax
import jax.numpy as jnp
from jax.experimental import pallas as pl
from jax.experimental.pallas import tpu as pltpu

_EPS = 1e-5                     # nn.BatchNorm2d default eps
_LANE = 128                     # TPU lane width
_NEG_BIG = -1e30                # additive mask value (ReLU(y - 1e30) == 0 for finite y)
_VMEM_LIMIT = 48 * 1024 * 1024  # explicit scoped-VMEM budget (fits v7x's 64 MiB)


# ---------------------------------------------------------------------------
# Host-side (glue): linear operators encoding AdaptiveAvgPool2d and
# F.interpolate(bilinear, align_corners=True).
# ---------------------------------------------------------------------------
def _adaptive_pool_matrix(in_size, bin_size):
    """Row i averages x[start:end] using PyTorch's AdaptiveAvgPool index rule."""
    P = np.zeros((bin_size, in_size), dtype=np.float32)
    for i in range(bin_size):
        start = (i * in_size) // bin_size
        end = -((-(i + 1) * in_size) // bin_size)  # ceil((i+1)*in/bin)
        P[i, start:end] = 1.0 / (end - start)
    return P


def _bilinear_up_matrix(out_size, in_size):
    """align_corners=True bilinear interpolation matrix of shape (out, in)."""
    U = np.zeros((out_size, in_size), dtype=np.float32)
    if in_size == 1:
        U[:, 0] = 1.0
        return U
    for o in range(out_size):
        src = o * (in_size - 1) / (out_size - 1)
        i0 = int(np.floor(src))
        i1 = min(i0 + 1, in_size - 1)
        frac = src - i0
        U[o, i0] += 1.0 - frac
        U[o, i1] += frac
    return U


# ---------------------------------------------------------------------------
# Kernel 1: f32 passthrough of x into the concat output's first C channels,
# pooled = x @ AT accumulated over HW tiles, then fused 1x1 conv (BN scale
# folded) + additive bias/mask + ReLU on the last HW step.
# Grid: (N, n_hw) with hw as the reduction ("arbitrary") axis.
# ---------------------------------------------------------------------------
def _pool_conv_bn_relu_kernel(x_ref, at_ref, w_ref, bias_ref, y_ref, a_ref,
                              p_acc):
    hw = pl.program_id(1)

    @pl.when(hw == 0)
    def _():
        p_acc[...] = jnp.zeros_like(p_acc)

    # Exact f32 passthrough — reuses the x tile already in VMEM, so x is read
    # from HBM exactly once for the whole op.
    y_ref[0] = x_ref[0]

    # Partial adaptive-avg-pool contribution of this HW tile (bf16 x f32 acc).
    xb = x_ref[0].astype(jnp.bfloat16)                          # (C, hw_tile)
    p_acc[...] += jnp.dot(xb, at_ref[...],
                          preferred_element_type=jnp.float32)   # (C, SB2P)

    @pl.when(hw == pl.num_programs(1) - 1)
    def _():
        # All stages' 1x1 convs in one matmul; bias_ref carries the folded BN
        # shift on the block diagonal and -1e30 elsewhere, so ReLU(y + bias)
        # zeroes the cross-stage products in a single elementwise op.
        y = jnp.dot(w_ref[...], p_acc[...].astype(jnp.bfloat16),
                    preferred_element_type=jnp.float32)         # (CO, SB2P)
        a_ref[0] = jnp.maximum(y + bias_ref[...], 0.0).astype(a_ref.dtype)


# ---------------------------------------------------------------------------
# Kernel 2: bilinear upsample of the tiny activation slab back to HW (single
# K<=128 MXU matmul over the stacked operator).  The stage channels are
# written into the concat buffer produced by kernel 1 via input/output
# aliasing; the passthrough channels are left untouched.
# ---------------------------------------------------------------------------
def _upsample_kernel(a_ref, ut_ref, y_hbm_ref, o_ref):
    del y_hbm_ref  # aliased to the output; only present to carry the passthrough.
    up = jnp.dot(a_ref[0], ut_ref[...],
                 preferred_element_type=jnp.float32)            # (CO, hw_tile)
    o_ref[0] = up.astype(o_ref.dtype)


def ppm_forward(x, fused, *, hw_tile=256):
    """x: (N, C, H, W) float32 -> (N, 2*C, H, W), matching torch PPM.forward."""
    N, C, H, W = x.shape
    HW = H * W
    CO, SB2P = fused["bias"].shape
    # The channel-block aliasing trick needs the stage channels to span exactly
    # one block of size CO == C (true for out_channels = C // len(bins)).
    assert CO == C, "PPM requires in_channels divisible by len(bin_sizes)"
    hw_tile = min(hw_tile, HW)
    # TODO(synk): pad H*W up to a multiple of 128 for shapes that need it.
    assert HW % hw_tile == 0 and hw_tile % _LANE == 0, \
        "H*W must be a multiple of the lane tile"
    n_hw = HW // hw_tile
    x_flat = x.reshape(N, C, HW)

    y_buf, a = pl.pallas_call(
        _pool_conv_bn_relu_kernel,
        out_shape=(jax.ShapeDtypeStruct((N, C + CO, HW), jnp.float32),
                   jax.ShapeDtypeStruct((N, CO, SB2P), jnp.bfloat16)),
        grid=(N, n_hw),
        in_specs=[
            pl.BlockSpec((1, C, hw_tile), lambda n, h: (n, 0, h)),   # x tile
            pl.BlockSpec((hw_tile, SB2P), lambda n, h: (h, 0)),      # AT tile
            pl.BlockSpec((CO, C), lambda n, h: (0, 0),               # folded conv W
                         pipeline_mode=pl.Buffered(1)),
            pl.BlockSpec((CO, SB2P), lambda n, h: (0, 0),            # fused bias/mask
                         pipeline_mode=pl.Buffered(1)),
        ],
        out_specs=(
            pl.BlockSpec((1, C, hw_tile), lambda n, h: (n, 0, h)),   # x passthrough
            pl.BlockSpec((1, CO, SB2P), lambda n, h: (n, 0, 0)),     # activations
        ),
        scratch_shapes=[pltpu.VMEM((C, SB2P), jnp.float32)],
        compiler_params=pltpu.CompilerParams(
            dimension_semantics=("parallel", "arbitrary"),
            vmem_limit_bytes=_VMEM_LIMIT),
    )(x_flat, fused["at"], fused["w_all"], fused["bias"])

    out = pl.pallas_call(
        _upsample_kernel,
        out_shape=jax.ShapeDtypeStruct((N, C + CO, HW), jnp.float32),
        grid=(N, n_hw),
        in_specs=[
            pl.BlockSpec((1, CO, SB2P), lambda n, h: (n, 0, 0)),     # activations
            pl.BlockSpec((SB2P, hw_tile), lambda n, h: (0, h)),      # UT tile
            pl.BlockSpec(memory_space=pl.ANY),                       # aliased concat buf
        ],
        out_specs=pl.BlockSpec((1, CO, hw_tile), lambda n, h: (n, 1, h)),
        input_output_aliases={2: 0},
        compiler_params=pltpu.CompilerParams(
            dimension_semantics=("parallel", "parallel"),
            vmem_limit_bytes=_VMEM_LIMIT),
    )(a, fused["ut"], y_buf)

    return out.reshape(N, C + CO, H, W)


# ---------------------------------------------------------------------------
# Parameters: raw per-stage params (for the reference) + fused/folded operators
# for the Pallas kernels.
# ---------------------------------------------------------------------------
def init_ppm_params(in_channels, bin_sizes, H, W, key):
    C = in_channels
    O = C // len(bin_sizes)
    CO = O * len(bin_sizes)
    HW = H * W
    SB2 = sum(b * b for b in bin_sizes)
    SB2P = ((SB2 + _LANE - 1) // _LANE) * _LANE   # lane-pad the pooled axis

    at = np.zeros((HW, SB2P), np.float32)
    ut = np.zeros((SB2P, HW), np.float32)
    w_all = np.zeros((CO, C), np.float32)
    bias_all = np.full((CO, SB2P), _NEG_BIG, np.float32)   # additive mask + BN shift

    stages = []
    col = 0
    for s, b in enumerate(bin_sizes):
        key, k1, k2 = jax.random.split(key, 3)
        wc = np.asarray(jax.random.normal(k1, (O, C), jnp.float32)) * 0.2
        bias = np.asarray(jax.random.normal(k2, (O,), jnp.float32)) * 0.1
        gamma = 1.0 + 0.05 * np.arange(O, dtype=np.float32)
        beta = 0.02 * np.arange(O, dtype=np.float32) - 0.01
        mean = 0.03 * np.arange(O, dtype=np.float32)
        var = 1.0 + 0.1 * np.arange(O, dtype=np.float32)

        inv = gamma / np.sqrt(var + _EPS)            # BN scale
        shift = beta + inv * (bias - mean)           # folded conv-bias + BN shift

        Ph = _adaptive_pool_matrix(H, b)
        Pw = _adaptive_pool_matrix(W, b)
        Uh = _bilinear_up_matrix(H, b)
        Uw = _bilinear_up_matrix(W, b)

        r0, r1 = s * O, (s + 1) * O
        c0, c1 = col, col + b * b
        at[:, c0:c1] = np.kron(Ph, Pw).T             # (HW, b*b) pooling columns
        ut[c0:c1, :] = np.kron(Uh, Uw).T             # (b*b, HW) upsample rows
        w_all[r0:r1, :] = inv[:, None] * wc          # BN scale folded into W
        bias_all[r0:r1, c0:c1] = shift[:, None]      # shift on block diag only
        col = c1

        stages.append(dict(
            wc=jnp.asarray(wc), bias=jnp.asarray(bias),
            gamma=jnp.asarray(gamma), beta=jnp.asarray(beta),
            mean=jnp.asarray(mean), var=jnp.asarray(var),
            Ph=jnp.asarray(Ph), Pw=jnp.asarray(Pw),
            Uh=jnp.asarray(Uh), Uw=jnp.asarray(Uw)))

    fused = dict(
        at=jnp.asarray(at, jnp.bfloat16),
        ut=jnp.asarray(ut, jnp.bfloat16),
        w_all=jnp.asarray(w_all, jnp.bfloat16),
        bias=jnp.asarray(bias_all, jnp.float32))
    return fused, stages


# Pure-JAX reference mimicking the PyTorch op order (pool -> conv -> BN -> ReLU -> interp).
def ppm_reference(x, stages):
    outs = [x]
    for st in stages:
        pooled = jnp.einsum('ih,nchw,jw->ncij', st["Ph"], x, st["Pw"])
        z = jnp.einsum('oc,ncij->noij', st["wc"], pooled) + st["bias"][None, :, None, None]
        inv = st["gamma"] / jnp.sqrt(st["var"] + _EPS)
        zn = (z - st["mean"][None, :, None, None]) * inv[None, :, None, None] \
            + st["beta"][None, :, None, None]
        act = jnp.maximum(zn, 0.0)
        up = jnp.einsum('hi,noij,wj->nohw', st["Uh"], act, st["Uw"])
        outs.append(up)
    return jnp.concatenate(outs, axis=1)


if __name__ == "__main__":
    N, C, H, W = 2, 8, 16, 16
    bin_sizes = [1, 2, 3, 6]

    key = jax.random.PRNGKey(0)
    key, kx = jax.random.split(key)
    x = jax.random.normal(kx, (N, C, H, W), jnp.float32)

    fused, stages = init_ppm_params(C, bin_sizes, H, W, key)

    fwd = jax.jit(functools.partial(ppm_forward, hw_tile=256))
    out = jax.block_until_ready(fwd(x, fused))
    assert out.shape == (N, 2 * C, H, W), out.shape

    ref = np.asarray(ppm_reference(x, stages))
    got = np.asarray(out)

    # Channels [0:C] are the exact f32 passthrough of x (written by kernel 1,
    # preserved through kernel 2's aliased output).
    np.testing.assert_array_equal(got[:, :C], np.asarray(x))
    # Stage channels use bf16 MXU operands (f32 accumulation) -> looser tolerance.
    np.testing.assert_allclose(got[:, C:], ref[:, C:], rtol=2e-2, atol=2e-2)

    print("KERNEL_OK")
</pallas_src>

<mosaic_0001>
module attributes {stable_mosaic.version = 11 : i64} {
  func.func @_pool_conv_bn_relu_kernel(%arg0: i32, %arg1: i32, %arg2: memref<1x8x256xf32, #tpu.memory_space<vmem>>, %arg3: memref<256x128xbf16, #tpu.memory_space<vmem>>, %arg4: memref<8x8xbf16, #tpu.memory_space<vmem>>, %arg5: memref<8x128xf32, #tpu.memory_space<vmem>>, %arg6: memref<1x8x256xf32, #tpu.memory_space<vmem>>, %arg7: memref<1x8x128xbf16, #tpu.memory_space<vmem>>, %arg8: memref<8x128xf32, #tpu.memory_space<vmem>>) attributes {dimension_semantics = [#tpu.dimension_semantics<parallel>, #tpu.dimension_semantics<arbitrary>], iteration_bounds = array<i64: 2, 1>, scalar_prefetch = 0 : i64, scratch_operands = 1 : i64, tpu.core_type = #tpu.core_type<tc>, window_params = [{transform_indices = @transform_0, window_bounds = array<i64: 1, 8, 256>}, {transform_indices = @transform_1, window_bounds = array<i64: 256, 128>}, {pipeline_mode = #tpu.pipeline_mode<synchronous>, transform_indices = @transform_2, window_bounds = array<i64: 8, 8>}, {pipeline_mode = #tpu.pipeline_mode<synchronous>, transform_indices = @transform_3, window_bounds = array<i64: 8, 128>}, {transform_indices = @transform_4, window_bounds = array<i64: 1, 8, 256>}, {transform_indices = @transform_5, window_bounds = array<i64: 1, 8, 128>}]} {
    %c0_i32 = arith.constant 0 : i32
    %0 = arith.cmpi eq, %arg1, %c0_i32 : i32
    %1 = arith.extui %0 : i1 to i32
    %c0_i32_0 = arith.constant 0 : i32
    %2 = arith.cmpi ne, %1, %c0_i32_0 : i32
    scf.if %2 {
      %cst_17 = arith.constant 0.000000e+00 : f32
      %19 = vector.broadcast %cst_17 : f32 to vector<8x128xf32>
      %c0_18 = arith.constant 0 : index
      %c0_19 = arith.constant 0 : index
      %20 = vector.load %arg8[%c0_18, %c0_19] : memref<8x128xf32, #tpu.memory_space<vmem>>, vector<8x128xf32>
      tpu.vector_store %arg8[%c0_18, %c0_19], %19 {strides = array<i32>} : memref<8x128xf32, #tpu.memory_space<vmem>>, vector<8x128xf32>,
    } else {
    }
    %c0 = arith.constant 0 : index
    %c0_1 = arith.constant 0 : index
    %c0_2 = arith.constant 0 : index
    %3 = vector.load %arg2[%c0, %c0_1, %c0_2] : memref<1x8x256xf32, #tpu.memory_space<vmem>>, vector<1x8x256xf32>
    %4 = vector.shape_cast %3 : vector<1x8x256xf32> to vector<8x256xf32>
    %c0_3 = arith.constant 0 : index
    %c0_4 = arith.constant 0 : index
    %c0_5 = arith.constant 0 : index
    %5 = vector.load %arg6[%c0_3, %c0_4, %c0_5] : memref<1x8x256xf32, #tpu.memory_space<vmem>>, vector<1x8x256xf32>
    %6 = vector.shape_cast %5 : vector<1x8x256xf32> to vector<8x256xf32>
    %7 = vector.shape_cast %4 : vector<8x256xf32> to vector<1x8x256xf32>
    tpu.vector_store %arg6[%c0_3, %c0_4, %c0_5], %7 {strides = array<i32>} : memref<1x8x256xf32, #tpu.memory_space<vmem>>, vector<1x8x256xf32>,
    %c0_6 = arith.constant 0 : index
    %c0_7 = arith.constant 0 : index
    %c0_8 = arith.constant 0 : index
    %8 = vector.load %arg2[%c0_6, %c0_7, %c0_8] : memref<1x8x256xf32, #tpu.memory_space<vmem>>, vector<1x8x256xf32>
    %9 = vector.shape_cast %8 : vector<1x8x256xf32> to vector<8x256xf32>
    %10 = arith.truncf %9 : vector<8x256xf32> to vector<8x256xbf16>
    %c0_9 = arith.constant 0 : index
    %c0_10 = arith.constant 0 : index
    %11 = vector.load %arg8[%c0_9, %c0_10] : memref<8x128xf32, #tpu.memory_space<vmem>>, vector<8x128xf32>
    %c0_11 = arith.constant 0 : index
    %c0_12 = arith.constant 0 : index
    %12 = vector.load %arg3[%c0_11, %c0_12] : memref<256x128xbf16, #tpu.memory_space<vmem>>, vector<256x128xbf16>
    %cst = arith.constant dense<0.000000e+00> : vector<8x128xf32>
    %13 = tpu.matmul %10, %12, %cst {dimension_numbers = #tpu.dot_dimension_numbers<[1], [0], [0], [1], [0, 0, 1, 1], [], []>} : vector<8x256xbf16>, vector<256x128xbf16>, vector<8x128xf32> -> vector<8x128xf32>
    %14 = arith.addf %11, %13 : vector<8x128xf32>
    %c0_13 = arith.constant 0 : index
    %c0_14 = arith.constant 0 : index
    %15 = vector.load %arg8[%c0_13, %c0_14] : memref<8x128xf32, #tpu.memory_space<vmem>>, vector<8x128xf32>
    tpu.vector_store %arg8[%c0_13, %c0_14], %14 {strides = array<i32>} : memref<8x128xf32, #tpu.memory_space<vmem>>, vector<8x128xf32>,
    %c0_i32_15 = arith.constant 0 : i32
    %16 = arith.cmpi eq, %arg1, %c0_i32_15 : i32
    %17 = arith.extui %16 : i1 to i32
    %c0_i32_16 = arith.constant 0 : i32
    %18 = arith.cmpi ne, %17, %c0_i32_16 : i32
    scf.if %18 {
      %c0_17 = arith.constant 0 : index
      %c0_18 = arith.constant 0 : index
      %19 = vector.load %arg4[%c0_17, %c0_18] : memref<8x8xbf16, #tpu.memory_space<vmem>>, vector<8x8xbf16>
      %c0_19 = arith.constant 0 : index
      %c0_20 = arith.constant 0 : index
      %20 = vector.load %arg8[%c0_19, %c0_20] : memref<8x128xf32, #tpu.memory_space<vmem>>, vector<8x128xf32>
      %21 = arith.truncf %20 : vector<8x128xf32> to vector<8x128xbf16>
      %cst_21 = arith.constant dense<0.000000e+00> : vector<8x128xf32>
      %22 = tpu.matmul %19, %21, %cst_21 {dimension_numbers = #tpu.dot_dimension_numbers<[1], [0], [0], [1], [0, 0, 1, 1], [], []>} : vector<8x8xbf16>, vector<8x128xbf16>, vector<8x128xf32> -> vector<8x128xf32>
      %c0_22 = arith.constant 0 : index
      %c0_23 = arith.constant 0 : index
      %23 = vector.load %arg5[%c0_22, %c0_23] : memref<8x128xf32, #tpu.memory_space<vmem>>, vector<8x128xf32>
      %24 = arith.addf %22, %23 : vector<8x128xf32>
      %cst_24 = arith.constant 0.000000e+00 : f32
      %25 = vector.broadcast %cst_24 : f32 to vector<8x128xf32>
      %26 = arith.maximumf %24, %25 : vector<8x128xf32>
      %27 = arith.truncf %26 : vector<8x128xf32> to vector<8x128xbf16>
      %c0_25 = arith.constant 0 : index
      %c0_26 = arith.constant 0 : index
      %c0_27 = arith.constant 0 : index
      %28 = vector.load %arg7[%c0_25, %c0_26, %c0_27] : memref<1x8x128xbf16, #tpu.memory_space<vmem>>, vector<1x8x128xbf16>
      %29 = vector.shape_cast %28 : vector<1x8x128xbf16> to vector<8x128xbf16>
      %30 = vector.shape_cast %27 : vector<8x128xbf16> to vector<1x8x128xbf16>
      tpu.vector_store %arg7[%c0_25, %c0_26, %c0_27], %30 {strides = array<i32>} : memref<1x8x128xbf16, #tpu.memory_space<vmem>>, vector<1x8x128xbf16>,
    } else {
    }
    return
  }
  func.func @transform_0(%arg0: i32, %arg1: i32) -> (i32, i32, i32) {
    %c0_i32 = arith.constant 0 : i32
    %c0_i32_0 = arith.constant 0 : i32
    return %arg0, %c0_i32, %arg1 : i32, i32, i32
  }
  func.func @transform_1(%arg0: i32, %arg1: i32) -> (i32, i32) {
    %c0_i32 = arith.constant 0 : i32
    %c0_i32_0 = arith.constant 0 : i32
    return %arg1, %c0_i32 : i32, i32
  }
  func.func @transform_2(%arg0: i32, %arg1: i32) -> (i32, i32) {
    %c0_i32 = arith.constant 0 : i32
    %c0_i32_0 = arith.constant 0 : i32
    %c0_i32_1 = arith.constant 0 : i32
    return %c0_i32, %c0_i32_0 : i32, i32
  }
  func.func @transform_3(%arg0: i32, %arg1: i32) -> (i32, i32) {
    %c0_i32 = arith.constant 0 : i32
    %c0_i32_0 = arith.constant 0 : i32
    %c0_i32_1 = arith.constant 0 : i32
    return %c0_i32, %c0_i32_0 : i32, i32
  }
  func.func @transform_4(%arg0: i32, %arg1: i32) -> (i32, i32, i32) {
    %c0_i32 = arith.constant 0 : i32
    %c0_i32_0 = arith.constant 0 : i32
    return %arg0, %c0_i32, %arg1 : i32, i32, i32
  }
  func.func @transform_5(%arg0: i32, %arg1: i32) -> (i32, i32, i32) {
    %c0_i32 = arith.constant 0 : i32
    %c0_i32_0 = arith.constant 0 : i32
    %c0_i32_1 = arith.constant 0 : i32
    return %arg0, %c0_i32, %c0_i32_0 : i32, i32, i32
  }
}

module attributes {stable_mosaic.version = 11 : i64} {
  func.func @_upsample_kernel(%arg0: i32, %arg1: i32, %arg2: memref<1x8x128xbf16, #tpu.memory_space<vmem>>, %arg3: memref<128x256xbf16, #tpu.memory_space<vmem>>, %arg4: memref<2x16x256xf32, #tpu.memory_space<any>>, %arg5: memref<1x8x256xf32, #tpu.memory_space<vmem>>) attributes {dimension_semantics = [#tpu.dimension_semantics<parallel>, #tpu.dimension_semantics<parallel>], iteration_bounds = array<i64: 2, 1>, scalar_prefetch = 0 : i64, scratch_operands = 0 : i64, tpu.core_type = #tpu.core_type<tc>, window_params = [{transform_indices = @transform_0, window_bounds = array<i64: 1, 8, 128>}, {transform_indices = @transform_1, window_bounds = array<i64: 128, 256>}, {}, {transform_indices = @transform_3, window_bounds = array<i64: 1, 8, 256>}]} {
    %c0 = arith.constant 0 : index
    %c0_0 = arith.constant 0 : index
    %c0_1 = arith.constant 0 : index
    %0 = vector.load %arg2[%c0, %c0_0, %c0_1] : memref<1x8x128xbf16, #tpu.memory_space<vmem>>, vector<1x8x128xbf16>
    %1 = vector.shape_cast %0 : vector<1x8x128xbf16> to vector<8x128xbf16>
    %c0_2 = arith.constant 0 : index
    %c0_3 = arith.constant 0 : index
    %2 = vector.load %arg3[%c0_2, %c0_3] : memref<128x256xbf16, #tpu.memory_space<vmem>>, vector<128x256xbf16>
    %cst = arith.constant dense<0.000000e+00> : vector<8x256xf32>
    %3 = tpu.matmul %1, %2, %cst {dimension_numbers = #tpu.dot_dimension_numbers<[1], [0], [0], [1], [0, 0, 1, 1], [], []>} : vector<8x128xbf16>, vector<128x256xbf16>, vector<8x256xf32> -> vector<8x256xf32>
    %c0_4 = arith.constant 0 : index
    %c0_5 = arith.constant 0 : index
    %c0_6 = arith.constant 0 : index
    %4 = vector.load %arg5[%c0_4, %c0_5, %c0_6] : memref<1x8x256xf32, #tpu.memory_space<vmem>>, vector<1x8x256xf32>
    %5 = vector.shape_cast %4 : vector<1x8x256xf32> to vector<8x256xf32>
    %6 = vector.shape_cast %3 : vector<8x256xf32> to vector<1x8x256xf32>
    tpu.vector_store %arg5[%c0_4, %c0_5, %c0_6], %6 {strides = array<i32>} : memref<1x8x256xf32, #tpu.memory_space<vmem>>, vector<1x8x256xf32>,
    return
  }
  func.func @transform_0(%arg0: i32, %arg1: i32) -> (i32, i32, i32) {
    %c0_i32 = arith.constant 0 : i32
    %c0_i32_0 = arith.constant 0 : i32
    %c0_i32_1 = arith.constant 0 : i32
    return %arg0, %c0_i32, %c0_i32_0 : i32, i32, i32
  }
  func.func @transform_1(%arg0: i32, %arg1: i32) -> (i32, i32) {
    %c0_i32 = arith.constant 0 : i32
    %c0_i32_0 = arith.constant 0 : i32
    return %c0_i32, %arg1 : i32, i32
  }
  func.func @transform_3(%arg0: i32, %arg1: i32) -> (i32, i32, i32) {
    %c1_i32 = arith.constant 1 : i32
    %c0_i32 = arith.constant 0 : i32
    return %arg0, %c1_i32, %arg1 : i32, i32, i32
  }
}

</mosaic_0001>

<llo_original>
// kernel: ppm_forward.3
$region0: #{ppm_forward.3}
  #allocation0 [shape = 'u32[]', space=smem, size = 0x4, offset = 0x4, fixed_abs, tag = 'smem constant byte address 0x4 - core index']
  #allocation1 [shape = 'u32[72,128]{1,0:T(1,128)}', space=vmem, size = 0x9000, scoped, tag = 'internal scratch']
  %s0 = inlined_call_operand.vmem [shape: bf16[2,8,128], index: 0, kind: input, shape index: {}]
  %s1 = inlined_call_operand.vmem [shape: bf16[128,256], index: 1, kind: input, shape index: {}]
  %s2 = inlined_call_operand.vmem [shape: f32[2,16,256], index: 2, kind: input, shape index: {}, may-alias: {2,3}]
  %s3 = inlined_call_operand.vmem [shape: f32[2,16,256], index: 3, kind: output, shape index: {}, may-alias: {2,3}]
  %s4 = sld [smem:[#allocation0]]
  $region41: #{ppm_forward.3} parent=0
    _
  %s6 = ssub.s32 1, %s4
  %s7 = scalar_select 0, %s6, %s4
  loop: start=0, step=1, limit=4
  $region2: #{ppm_forward.3} parent=0 // loop_pre_header
    _
  $region3: #{ppm_forward.3} parent=0 // loop_header
    %s9 = sphi 0, %s13
    %p10 = scmp.ge.s32.totalorder %s9, 4
    %s16 = sphi 0, %s28
    %s17 = sphi 0, %s24
    %s18 = sphi 0, %s16
    %s19 = sphi 0, %s17
    %s20 = sphi 0, %s18
    %s21 = sphi 0, %s19
    %s31 = sphi 0, %s33
    %s34 = sphi 0, %s31
    %s35 = sphi 0, %s34
    %s51 = sphi 0, %s35
    %s57 = sphi 0, %s59
    %s60 = sphi 0, %s57
    %s61 = sphi 0, %s60
    %s77 = sphi 0, %s61
    %s85 = sphi 0, %s87
    %s88 = sphi 0, %s85
    %s89 = sphi 0, %s88
    %s105 = sphi 0, %s89
  $region4: #{ppm_forward.3} parent=0 // loop_header_branch
    %12 = sbr.rel (%p10) target = $region8
  $region5: #{ppm_forward.3} parent=0 // loop_body
    %s14 = ssub.s32 %s9, 1
    %s15 = ssub.s32 %s9, 2
    %s22 = sadd.s32 1, %s17
    %p23 = scmp.ge.s32.totalorder %s22, 1
    %s24 = scalar_select %p23, 0, %s22
    %s25 = sadd.s32 1, %s16
    %s26 = scalar_select %p23, %s25, %s16
    %p27 = scmp.ge.s32.totalorder %s26, 2
    %s28 = scalar_select %p27, 0, %s26
    %s29 = ssub.s32 %s16, %s28
    %p30 = scmp.eq.s32.totalorder %s29, 0
    %s32 = sadd.s32 %s31, 1
    %s33 = scalar_select %p30, %s31, %s32
    %p36 = pneg %p30
    %p37 = scmp.eq.s32.totalorder %s9, 1
    %p38 = por %p36, %p37
    %p39 = scmp.ne.s32.totalorder %s31, %s34
    %p40 = scmp.eq.s32.totalorder %s9, 0
    %p41 = por %p39, %p40
    %p42 = scmp.ne.s32.totalorder %s31, %s34
    %p43 = scmp.eq.s32.totalorder %s14, 1
    %p44 = por %p42, %p43
    %p45 = scmp.ne.s32.totalorder %s34, %s35
    %p46 = scmp.eq.s32.totalorder %s14, 0
    %p47 = por %p45, %p46
    %p48 = scmp.ne.s32.totalorder %s34, %s35
    %p49 = scmp.eq.s32.totalorder %s15, 1
    %p50 = por %p48, %p49
    %p52 = scmp.ne.s32.totalorder %s35, %s51
    %p53 = scmp.eq.s32.totalorder %s15, 0
    %p54 = por %p52, %p53
    %s55 = ssub.s32 %s17, %s24
    %p56 = scmp.eq.s32.totalorder %s55, 0
    %s58 = sadd.s32 %s57, 1
    %s59 = scalar_select %p56, %s57, %s58
    %p62 = pneg %p56
    %p63 = scmp.eq.s32.totalorder %s9, 1
    %p64 = por %p62, %p63
    %p65 = scmp.ne.s32.totalorder %s57, %s60
    %p66 = scmp.eq.s32.totalorder %s9, 0
    %p67 = por %p65, %p66
    %p68 = scmp.ne.s32.totalorder %s57, %s60
    %p69 = scmp.eq.s32.totalorder %s14, 1
    %p70 = por %p68, %p69
    %p71 = scmp.ne.s32.totalorder %s60, %s61
    %p72 = scmp.eq.s32.totalorder %s14, 0
    %p73 = por %p71, %p72
    %p74 = scmp.ne.s32.totalorder %s60, %s61
    %p75 = scmp.eq.s32.totalorder %s15, 1
    %p76 = por %p74, %p75
    %p78 = scmp.ne.s32.totalorder %s61, %s77
    %p79 = scmp.eq.s32.totalorder %s15, 0
    %p80 = por %p78, %p79
    %s81 = ssub.s32 %s16, %s28
    %s82 = ssub.s32 %s17, %s24
    %s83 = sor.u32 %s81, %s82
    %p84 = scmp.eq.s32.totalorder %s83, 0
    %s86 = sadd.s32 %s85, 1
    %s87 = scalar_select %p84, %s85, %s86
    %p90 = pneg %p84
    %p91 = scmp.eq.s32.totalorder %s9, 1
    %p92 = por %p90, %p91
    %p93 = scmp.ne.s32.totalorder %s85, %s88
    %p94 = scmp.eq.s32.totalorder %s9, 0
    %p95 = por %p93, %p94
    %p96 = scmp.ne.s32.totalorder %s85, %s88
    %p97 = scmp.eq.s32.totalorder %s14, 1
    %p98 = por %p96, %p97
    %p99 = scmp.ne.s32.totalorder %s88, %s89
    %p100 = scmp.eq.s32.totalorder %s14, 0
    %p101 = por %p99, %p100
    %p102 = scmp.ne.s32.totalorder %s88, %s89
    %p103 = scmp.eq.s32.totalorder %s15, 1
    %p104 = por %p102, %p103
    %p106 = scmp.ne.s32.totalorder %s89, %s105
    %p107 = scmp.eq.s32.totalorder %s15, 0
    %p108 = por %p106, %p107
    %p109 = scmp.le.s32.totalorder 1, %s9
    %p110 = scmp.lt.s32.totalorder %s9, 3
    %p111 = pnand %p109, %p110
    %p112 = pneg %p111
    // Predicated region
    $region9: #{ppm_forward.3} parent=5 // pred_check
      _
    $region10: #{ppm_forward.3} parent=5 // pred_check_branch
      %114 = sbr.rel (%p111) target = $region12
    $region11: #{ppm_forward.3} parent=5 // pred_region
      %s115 = ssub.s32 %s9, 1
      // Predicated region
      $region13: #{ppm_forward.3} parent=11 // pred_check
        %p116 = pneg %p73
      $region14: #{ppm_forward.3} parent=11 // pred_check_branch
        %118 = sbr.rel (%p116) target = $region16
      $region15: #{ppm_forward.3} parent=11 // pred_region
        %s119 = smul.u32 2, %s19
        %p120 = scmp.lt.s32.totalorder %s119, 1
        %s121 = scalar_select %p120, %s119, 1
        %s122 = smul.addr %s121, 4
        %s123 = scalar_lea.vmem %s1, %s122
        %s124 = smul.u32 2, %s19
      $region16: #{ppm_forward.3} parent=11 // pred_fallthru
        _
    $region12: #{ppm_forward.3} parent=5 // pred_fallthru
      _
    %p125 = scmp.lt.s32.totalorder %s9, 2
    // Predicated region
    $region17: #{ppm_forward.3} parent=5 // pred_check
      %p126 = pneg %p125
    $region18: #{ppm_forward.3} parent=5 // pred_check_branch
      %128 = sbr.rel (%p126) target = $region20
    $region19: #{ppm_forward.3} parent=5 // pred_region
      // Predicated region
      $region21: #{ppm_forward.3} parent=19 // pred_check
        %p129 = pneg %p41
      $region22: #{ppm_forward.3} parent=19 // pred_check_branch
        %131 = sbr.rel (%p129) target = $region24
      $region23: #{ppm_forward.3} parent=19 // pred_region
        %p132 = scmp.lt.s32.totalorder %s16, 1
        %s133 = scalar_select %p132, %s16, 1
        %s134 = smul.addr %s133, 4
        %s135 = scalar_lea.vmem %s0, %s134
      $region24: #{ppm_forward.3} parent=19 // pred_fallthru
        _
    $region20: #{ppm_forward.3} parent=5 // pred_fallthru
      _
    %p136 = scmp.le.s32.totalorder 1, %s9
    %p137 = scmp.lt.s32.totalorder %s9, 3
    %p138 = pnand %p136, %p137
    %p139 = pneg %p138
    // Predicated region
    $region25: #{ppm_forward.3} parent=5 // pred_check
      _
    $region26: #{ppm_forward.3} parent=5 // pred_check_branch
      %141 = sbr.rel (%p138) target = $region28
    $region27: #{ppm_forward.3} parent=5 // pred_region
      %s142 = ssub.s32 %s9, 1
      %p143 = scmp.lt.s32.totalorder %s18, 1
      %s144 = scalar_select %p143, %s18, 1
      %s145 = smul.addr %s144, 4
      %s146 = scalar_lea.vmem %s0, %s145
      %p147 = pneg %p47
      %p148 = pneg %p44
      %s149 = smul.u32 2, %s19
      %p150 = scmp.lt.s32.totalorder %s149, 1
      %s151 = scalar_select %p150, %s149, 1
      %s152 = smul.addr %s151, 4
      %s153 = scalar_lea.vmem %s1, %s152
      %p154 = pneg %p73
      %p155 = pneg %p70
      %p156 = pneg %p101
      %p157 = pneg %p98
      %s158 = smul.u32 2, %s19
      %p159 = scmp.lt.s32.totalorder %s18, 1
      %s160 = scalar_select %p159, %s18, 1
      %p161 = scmp.lt.s32.totalorder %s158, 1
      %s162 = scalar_select %p161, %s158, 1
      %s163 = sadd.s32 %s162, 2
      %s164 = smul.addr %s160, 4
      %s165 = sadd.s32 %s163, %s164
      %s166 = smul.addr %s165, 8
      %s167 = scalar_lea.vmem %s3, %s166
      %p168 = scmp.lt.s32.totalorder %s18, 1
      %s169 = scalar_select %p168, %s18, 1
      %s170 = smul.addr %s169, 4
      %s171 = scalar_lea.vmem %s0, %s170
      %s172 = smul.u32 2, %s19
      %p173 = scmp.lt.s32.totalorder %s172, 1
      %s174 = scalar_select %p173, %s172, 1
      %s175 = smul.addr %s174, 4
      %s176 = scalar_lea.vmem %s1, %s175
      %s177 = smul.u32 2, %s19
      %s178 = smul.u32 2, %s19
      %p179 = scmp.lt.s32.totalorder %s18, 1
      %s180 = scalar_select %p179, %s18, 1
      %p181 = scmp.lt.s32.totalorder %s178, 1
      %s182 = scalar_select %p181, %s178, 1
      %s183 = sadd.s32 %s182, 2
      %s184 = smul.addr %s180, 4
      %s185 = sadd.s32 %s183, %s184
      %s186 = smul.addr %s185, 8
      %s187 = scalar_lea.vmem %s3, %s186
      %s188 = smul.u32 2, %s19
      %v189 = vld [vmem:[%s171] sm:$0xf]
      %v190 = vld [vmem:[%s176] sm:$0xff]
      %v191 = vld [vmem:[%s176 + $0x8] sm:$0xff]
      %v192 = vld [vmem:[%s176 + $0x10] sm:$0xff]
      %v193 = vld [vmem:[%s176 + $0x18] sm:$0xff]
      %v194 = vld [vmem:[%s176 + $0x20] sm:$0xff]
      %v195 = vld [vmem:[%s176 + $0x28] sm:$0xff]
      %v196 = vld [vmem:[%s176 + $0x30] sm:$0xff]
      %v197 = vld [vmem:[%s176 + $0x38] sm:$0xff]
      %v198 = vld [vmem:[%s176 + $0x40] sm:$0xff]
      %v199 = vld [vmem:[%s176 + $0x48] sm:$0xff]
      %v200 = vld [vmem:[%s176 + $0x50] sm:$0xff]
      %v201 = vld [vmem:[%s176 + $0x58] sm:$0xff]
      %v202 = vld [vmem:[%s176 + $0x60] sm:$0xff]
      %v203 = vld [vmem:[%s176 + $0x68] sm:$0xff]
      %v204 = vld [vmem:[%s176 + $0x70] sm:$0xff]
      %v205 = vld [vmem:[%s176 + $0x78] sm:$0xff]
      %v222 = vunpack.c.l.b16 %v190
      %v223 = vunpack.c.h.b16 %v190
      %v224 = vunpack.c.l.b16 %v191
      %v225 = vunpack.c.h.b16 %v191
      %v226 = vunpack.c.l.b16 %v192
      %v227 = vunpack.c.h.b16 %v192
      %v228 = vunpack.c.l.b16 %v193
      %v229 = vunpack.c.h.b16 %v193
      %v230 = vunpack.c.l.b16 %v194
      %v231 = vunpack.c.h.b16 %v194
      %v232 = vunpack.c.l.b16 %v195
      %v233 = vunpack.c.h.b16 %v195
      %v234 = vunpack.c.l.b16 %v196
      %v235 = vunpack.c.h.b16 %v196
      %v236 = vunpack.c.l.b16 %v197
      %v237 = vunpack.c.h.b16 %v197
      %v238 = vunpack.c.l.b16 %v198
      %v239 = vunpack.c.h.b16 %v198
      %v240 = vunpack.c.l.b16 %v199
      %v241 = vunpack.c.h.b16 %v199
      %v242 = vunpack.c.l.b16 %v200
      %v243 = vunpack.c.h.b16 %v200
      %v244 = vunpack.c.l.b16 %v201
      %v245 = vunpack.c.h.b16 %v201
      %v246 = vunpack.c.l.b16 %v202
      %v247 = vunpack.c.h.b16 %v202
      %v248 = vunpack.c.l.b16 %v203
      %v249 = vunpack.c.h.b16 %v203
      %v250 = vunpack.c.l.b16 %v204
      %v251 = vunpack.c.h.b16 %v204
      %v252 = vunpack.c.l.b16 %v205
      %v253 = vunpack.c.h.b16 %v205
      %v254 = vpack.c.b16 %v224, %v222
      %v255 = vpack.c.b16 %v225, %v223
      %v256 = vpack.c.b16 %v228, %v226
      %v257 = vpack.c.b16 %v229, %v227
      %v258 = vpack.c.b16 %v232, %v230
      %v259 = vpack.c.b16 %v233, %v231
      %v260 = vpack.c.b16 %v236, %v234
      %v261 = vpack.c.b16 %v237, %v235
      %v262 = vpack.c.b16 %v240, %v238
      %v263 = vpack.c.b16 %v241, %v239
      %v264 = vpack.c.b16 %v244, %v242
      %v265 = vpack.c.b16 %v245, %v243
      %v266 = vpack.c.b16 %v248, %v246
      %v267 = vpack.c.b16 %v249, %v247
      %v268 = vpack.c.b16 %v252, %v250
      %v269 = vpack.c.b16 %v253, %v251
      %286 = vmatpush.bf16.msra.mxu0 %v268
      %287 = vmatpush.bf16.msra.mxu0 %v266
      %288 = vmatpush.bf16.msra.mxu0 %v264
      %289 = vmatpush.bf16.msra.mxu0 %v262
      %290 = vmatpush.bf16.msra.mxu0 %v260
      %291 = vmatpush.bf16.msra.mxu0 %v258
      %292 = vmatpush.bf16.msra.mxu0 %v256
      %293 = vmatpush.bf16.msra.mxu0 %v254
      %294 = vmatmul.bf16.gmra.mxu0 %v189
      %v295 = vpop.f32.mrf.mxu0
      %v296 = vadd.f32 0.0, %v295
      %v297 = vpop.f32.mrf.mxu0
      %298 = vdwg.mxu0
      %299 = vmatpush.bf16.msra.mxu0 %v269
      %300 = vmatpush.bf16.msra.mxu0 %v267
      %301 = vmatpush.bf16.msra.mxu0 %v265
      %302 = vmatpush.bf16.msra.mxu0 %v263
      %303 = vmatpush.bf16.msra.mxu0 %v261
      %304 = vmatpush.bf16.msra.mxu0 %v259
      %305 = vmatpush.bf16.msra.mxu0 %v257
      %306 = vmatpush.bf16.msra.mxu0 %v255
      %307 = vmatmul.bf16.gmra.mxu0 %v189
      %v308 = vpop.f32.mrf.mxu0
      %v309 = vadd.f32 0.0, %v308
      %v310 = vpop.f32.mrf.mxu0
      %311 = vdwg.mxu0
      %312 = vst [vmem:[%s187] sm:$0xff] %v296
      %313 = vst [vmem:[%s187 + $0x8] sm:$0xff] %v309
      %s314 = smul.u32 2, %s19
      %p315 = scmp.lt.s32.totalorder %s18, 1
      %s316 = scalar_select %p315, %s18, 1
      %p317 = scmp.lt.s32.totalorder %s314, 1
      %s318 = scalar_select %p317, %s314, 1
      %s319 = sadd.s32 %s318, 2
      %s320 = smul.addr %s316, 4
      %s321 = sadd.s32 %s319, %s320
      %s322 = smul.addr %s321, 8
      %s323 = scalar_lea.vmem %s3, %s322
      // Predicated region
      $region29: #{ppm_forward.3} parent=27 // pred_check
        %p324 = pneg %p98
      $region30: #{ppm_forward.3} parent=27 // pred_check_branch
        %326 = sbr.rel (%p324) target = $region32
      $region31: #{ppm_forward.3} parent=27 // pred_region
        %s327 = smul.u32 2, %s19
      $region32: #{ppm_forward.3} parent=27 // pred_fallthru
        _
    $region28: #{ppm_forward.3} parent=5 // pred_fallthru
      _
    %p328 = scmp.le.s32.totalorder 2, %s9
    // Predicated region
    $region33: #{ppm_forward.3} parent=5 // pred_check
      %p329 = pneg %p328
    $region34: #{ppm_forward.3} parent=5 // pred_check_branch
      %331 = sbr.rel (%p329) target = $region36
    $region35: #{ppm_forward.3} parent=5 // pred_region
      %s332 = ssub.s32 %s9, 2
      // Predicated region
      $region37: #{ppm_forward.3} parent=35 // pred_check
        %p333 = pneg %p104
      $region38: #{ppm_forward.3} parent=35 // pred_check_branch
        %335 = sbr.rel (%p333) target = $region40
      $region39: #{ppm_forward.3} parent=35 // pred_region
        %s336 = smul.u32 2, %s21
        %p337 = scmp.lt.s32.totalorder %s20, 1
        %s338 = scalar_select %p337, %s20, 1
        %p339 = scmp.lt.s32.totalorder %s336, 1
        %s340 = scalar_select %p339, %s336, 1
        %s341 = sadd.s32 %s340, 2
        %s342 = smul.addr %s338, 4
        %s343 = sadd.s32 %s341, %s342
        %s344 = smul.addr %s343, 8
        %s345 = scalar_lea.vmem %s3, %s344
      $region40: #{ppm_forward.3} parent=35 // pred_fallthru
        _
    $region36: #{ppm_forward.3} parent=5 // pred_fallthru
      _
  $region6: #{ppm_forward.3} parent=0 // loop_footer
    %s13 = sadd.s32 1, %s9
  $region7: #{ppm_forward.3} parent=0 // loop_footer_branch
    %8 = sbr.rel target = $region3
  $region8: #{ppm_forward.3} parent=0 // loop_exit
    _

// kernel: ppm_forward.2
$region0: #{ppm_forward.2}
  #allocation0 [shape = 'u32[]', space=smem, size = 0x4, offset = 0x4, fixed_abs, tag = 'smem constant byte address 0x4 - core index']
  #allocation1 [shape = 'u32[72,128]{1,0:T(1,128)}', space=vmem, size = 0x9000, scoped, tag = 'internal scratch']
  #allocation2 [shape = 'f32[8,128]{1,0:T(8,128)}', space=vmem, size = 0x1000, scoped, tag = 'scratch operand']
  %s0 = inlined_call_operand.vmem [shape: f32[2,8,256], index: 0, kind: input, shape index: {}]
  %s1 = inlined_call_operand.vmem [shape: bf16[256,128], index: 1, kind: input, shape index: {}]
  %s2 = inlined_call_operand.vmem [shape: bf16[8,8], index: 2, kind: input, shape index: {}]
  %s3 = inlined_call_operand.vmem [shape: f32[8,128], index: 3, kind: input, shape index: {}]
  %s4 = inlined_call_operand.vmem [shape: f32[2,16,256], index: 4, kind: output, shape index: {0}]
  %s5 = inlined_call_operand.vmem [shape: bf16[2,8,128], index: 5, kind: output, shape index: {1}]
  %6 = xla_tuple %s4, %s5
  %s7 = sld [smem:[#allocation0]]
  $region65: #{ppm_forward.2} parent=0
    _
  %s9 = ssub.s32 1, %s7
  %s10 = scalar_select 0, %s9, %s7
  loop: start=0, step=1, limit=4
  $region2: #{ppm_forward.2} parent=0 // loop_pre_header
    _
  $region3: #{ppm_forward.2} parent=0 // loop_header
    %s12 = sphi 0, %s16
    %p13 = scmp.ge.s32.totalorder %s12, 4
    %s19 = sphi 0, %s31
    %s20 = sphi 0, %s27
    %s21 = sphi 0, %s19
    %s22 = sphi 0, %s20
    %s23 = sphi 0, %s21
    %s24 = sphi 0, %s22
    %s36 = sphi 0, %s38
    %s39 = sphi 0, %s36
    %s40 = sphi 0, %s39
    %s56 = sphi 0, %s40
    %s62 = sphi 0, %s64
    %s65 = sphi 0, %s62
    %s66 = sphi 0, %s65
    %s82 = sphi 0, %s66
    %s86 = sphi 0, %s86
    %s88 = sphi 0, %s86
    %s89 = sphi 0, %s88
    %s103 = sphi 0, %s89
    %s107 = sphi 0, %s107
    %s109 = sphi 0, %s107
    %s110 = sphi 0, %s109
    %s124 = sphi 0, %s110
    %s132 = sphi 0, %s134
    %s135 = sphi 0, %s132
    %s136 = sphi 0, %s135
    %s152 = sphi 0, %s136
    %s158 = sphi 0, %s160
    %s161 = sphi 0, %s158
    %s162 = sphi 0, %s161
    %s178 = sphi 0, %s162
  $region4: #{ppm_forward.2} parent=0 // loop_header_branch
    %15 = sbr.rel (%p13) target = $region8
  $region5: #{ppm_forward.2} parent=0 // loop_body
    %s17 = ssub.s32 %s12, 1
    %s18 = ssub.s32 %s12, 2
    %s25 = sadd.s32 1, %s20
    %p26 = scmp.ge.s32.totalorder %s25, 1
    %s27 = scalar_select %p26, 0, %s25
    %s28 = sadd.s32 1, %s19
    %s29 = scalar_select %p26, %s28, %s19
    %p30 = scmp.ge.s32.totalorder %s29, 2
    %s31 = scalar_select %p30, 0, %s29
    %s32 = ssub.s32 %s19, %s31
    %s33 = ssub.s32 %s20, %s27
    %s34 = sor.u32 %s32, %s33
    %p35 = scmp.eq.s32.totalorder %s34, 0
    %s37 = sadd.s32 %s36, 1
    %s38 = scalar_select %p35, %s36, %s37
    %p41 = pneg %p35
    %p42 = scmp.eq.s32.totalorder %s12, 1
    %p43 = por %p41, %p42
    %p44 = scmp.ne.s32.totalorder %s36, %s39
    %p45 = scmp.eq.s32.totalorder %s12, 0
    %p46 = por %p44, %p45
    %p47 = scmp.ne.s32.totalorder %s36, %s39
    %p48 = scmp.eq.s32.totalorder %s17, 1
    %p49 = por %p47, %p48
    %p50 = scmp.ne.s32.totalorder %s39, %s40
    %p51 = scmp.eq.s32.totalorder %s17, 0
    %p52 = por %p50, %p51
    %p53 = scmp.ne.s32.totalorder %s39, %s40
    %p54 = scmp.eq.s32.totalorder %s18, 1
    %p55 = por %p53, %p54
    %p57 = scmp.ne.s32.totalorder %s40, %s56
    %p58 = scmp.eq.s32.totalorder %s18, 0
    %p59 = por %p57, %p58
    %s60 = ssub.s32 %s20, %s27
    %p61 = scmp.eq.s32.totalorder %s60, 0
    %s63 = sadd.s32 %s62, 1
    %s64 = scalar_select %p61, %s62, %s63
    %p67 = pneg %p61
    %p68 = scmp.eq.s32.totalorder %s12, 1
    %p69 = por %p67, %p68
    %p70 = scmp.ne.s32.totalorder %s62, %s65
    %p71 = scmp.eq.s32.totalorder %s12, 0
    %p72 = por %p70, %p71
    %p73 = scmp.ne.s32.totalorder %s62, %s65
    %p74 = scmp.eq.s32.totalorder %s17, 1
    %p75 = por %p73, %p74
    %p76 = scmp.ne.s32.totalorder %s65, %s66
    %p77 = scmp.eq.s32.totalorder %s17, 0
    %p78 = por %p76, %p77
    %p79 = scmp.ne.s32.totalorder %s65, %s66
    %p80 = scmp.eq.s32.totalorder %s18, 1
    %p81 = por %p79, %p80
    %p83 = scmp.ne.s32.totalorder %s66, %s82
    %p84 = scmp.eq.s32.totalorder %s18, 0
    %p85 = por %p83, %p84
    %s87 = sadd.s32 %s86, 1
    %p90 = scmp.eq.s32.totalorder %s12, 1
    %p91 = scmp.ne.s32.totalorder %s86, %s88
    %p92 = scmp.eq.s32.totalorder %s12, 0
    %p93 = por %p91, %p92
    %p94 = scmp.ne.s32.totalorder %s86, %s88
    %p95 = scmp.eq.s32.totalorder %s17, 1
    %p96 = por %p94, %p95
    %p97 = scmp.ne.s32.totalorder %s88, %s89
    %p98 = scmp.eq.s32.totalorder %s17, 0
    %p99 = por %p97, %p98
    %p100 = scmp.ne.s32.totalorder %s88, %s89
    %p101 = scmp.eq.s32.totalorder %s18, 1
    %p102 = por %p100, %p101
    %p104 = scmp.ne.s32.totalorder %s89, %s103
    %p105 = scmp.eq.s32.totalorder %s18, 0
    %p106 = por %p104, %p105
    %s108 = sadd.s32 %s107, 1
    %p111 = scmp.eq.s32.totalorder %s12, 1
    %p112 = scmp.ne.s32.totalorder %s107, %s109
    %p113 = scmp.eq.s32.totalorder %s12, 0
    %p114 = por %p112, %p113
    %p115 = scmp.ne.s32.totalorder %s107, %s109
    %p116 = scmp.eq.s32.totalorder %s17, 1
    %p117 = por %p115, %p116
    %p118 = scmp.ne.s32.totalorder %s109, %s110
    %p119 = scmp.eq.s32.totalorder %s17, 0
    %p120 = por %p118, %p119
    %p121 = scmp.ne.s32.totalorder %s109, %s110
    %p122 = scmp.eq.s32.totalorder %s18, 1
    %p123 = por %p121, %p122
    %p125 = scmp.ne.s32.totalorder %s110, %s124
    %p126 = scmp.eq.s32.totalorder %s18, 0
    %p127 = por %p125, %p126
    %s128 = ssub.s32 %s19, %s31
    %s129 = ssub.s32 %s20, %s27
    %s130 = sor.u32 %s128, %s129
    %p131 = scmp.eq.s32.totalorder %s130, 0
    %s133 = sadd.s32 %s132, 1
    %s134 = scalar_select %p131, %s132, %s133
    %p137 = pneg %p131
    %p138 = scmp.eq.s32.totalorder %s12, 1
    %p139 = por %p137, %p138
    %p140 = scmp.ne.s32.totalorder %s132, %s135
    %p141 = scmp.eq.s32.totalorder %s12, 0
    %p142 = por %p140, %p141
    %p143 = scmp.ne.s32.totalorder %s132, %s135
    %p144 = scmp.eq.s32.totalorder %s17, 1
    %p145 = por %p143, %p144
    %p146 = scmp.ne.s32.totalorder %s135, %s136
    %p147 = scmp.eq.s32.totalorder %s17, 0
    %p148 = por %p146, %p147
    %p149 = scmp.ne.s32.totalorder %s135, %s136
    %p150 = scmp.eq.s32.totalorder %s18, 1
    %p151 = por %p149, %p150
    %p153 = scmp.ne.s32.totalorder %s136, %s152
    %p154 = scmp.eq.s32.totalorder %s18, 0
    %p155 = por %p153, %p154
    %s156 = ssub.s32 %s19, %s31
    %p157 = scmp.eq.s32.totalorder %s156, 0
    %s159 = sadd.s32 %s158, 1
    %s160 = scalar_select %p157, %s158, %s159
    %p163 = pneg %p157
    %p164 = scmp.eq.s32.totalorder %s12, 1
    %p165 = por %p163, %p164
    %p166 = scmp.ne.s32.totalorder %s158, %s161
    %p167 = scmp.eq.s32.totalorder %s12, 0
    %p168 = por %p166, %p167
    %p169 = scmp.ne.s32.totalorder %s158, %s161
    %p170 = scmp.eq.s32.totalorder %s17, 1
    %p171 = por %p169, %p170
    %p172 = scmp.ne.s32.totalorder %s161, %s162
    %p173 = scmp.eq.s32.totalorder %s17, 0
    %p174 = por %p172, %p173
    %p175 = scmp.ne.s32.totalorder %s161, %s162
    %p176 = scmp.eq.s32.totalorder %s18, 1
    %p177 = por %p175, %p176
    %p179 = scmp.ne.s32.totalorder %s162, %s178
    %p180 = scmp.eq.s32.totalorder %s18, 0
    %p181 = por %p179, %p180
    %p182 = scmp.le.s32.totalorder 1, %s12
    %p183 = scmp.lt.s32.totalorder %s12, 3
    %p184 = pnand %p182, %p183
    %p185 = pneg %p184
    // Predicated region
    $region9: #{ppm_forward.2} parent=5 // pred_check
      _
    $region10: #{ppm_forward.2} parent=5 // pred_check_branch
      %187 = sbr.rel (%p184) target = $region12
    $region11: #{ppm_forward.2} parent=5 // pred_region
      %s188 = ssub.s32 %s12, 1
      // Predicated region
      $region13: #{ppm_forward.2} parent=11 // pred_check
        %p189 = pneg %p78
      $region14: #{ppm_forward.2} parent=11 // pred_check_branch
        %191 = sbr.rel (%p189) target = $region16
      $region15: #{ppm_forward.2} parent=11 // pred_region
        %s192 = smul.u32 32, %s22
        %p193 = scmp.lt.s32.totalorder %s192, 31
        %s194 = scalar_select %p193, %s192, 31
        %s195 = smul.addr %s194, 4
        %s196 = scalar_lea.vmem %s1, %s195
        %s197 = smul.u32 32, %s22
      $region16: #{ppm_forward.2} parent=11 // pred_fallthru
        _
      // Predicated region
      $region17: #{ppm_forward.2} parent=11 // pred_check
        %p198 = pneg %p99
      $region18: #{ppm_forward.2} parent=11 // pred_check_branch
        %200 = sbr.rel (%p198) target = $region20
      $region19: #{ppm_forward.2} parent=11 // pred_region
        _
      $region20: #{ppm_forward.2} parent=11 // pred_fallthru
        _
      // Predicated region
      $region21: #{ppm_forward.2} parent=11 // pred_check
        %p201 = pneg %p120
      $region22: #{ppm_forward.2} parent=11 // pred_check_branch
        %203 = sbr.rel (%p201) target = $region24
      $region23: #{ppm_forward.2} parent=11 // pred_region
        _
      $region24: #{ppm_forward.2} parent=11 // pred_fallthru
        _
    $region12: #{ppm_forward.2} parent=5 // pred_fallthru
      _
    %p204 = scmp.lt.s32.totalorder %s12, 2
    // Predicated region
    $region25: #{ppm_forward.2} parent=5 // pred_check
      %p205 = pneg %p204
    $region26: #{ppm_forward.2} parent=5 // pred_check_branch
      %207 = sbr.rel (%p205) target = $region28
    $region27: #{ppm_forward.2} parent=5 // pred_region
      // Predicated region
      $region29: #{ppm_forward.2} parent=27 // pred_check
        %p208 = pneg %p46
      $region30: #{ppm_forward.2} parent=27 // pred_check_branch
        %210 = sbr.rel (%p208) target = $region32
      $region31: #{ppm_forward.2} parent=27 // pred_region
        %s211 = smul.u32 2, %s20
        %p212 = scmp.lt.s32.totalorder %s19, 1
        %s213 = scalar_select %p212, %s19, 1
        %p214 = scmp.lt.s32.totalorder %s211, 1
        %s215 = scalar_select %p214, %s211, 1
        %s216 = smul.addr %s213, 2
        %s217 = sadd.s32 %s215, %s216
        %s218 = smul.addr %s217, 8
        %s219 = scalar_lea.vmem %s0, %s218
        %s220 = smul.u32 2, %s20
      $region32: #{ppm_forward.2} parent=27 // pred_fallthru
        _
    $region28: #{ppm_forward.2} parent=5 // pred_fallthru
      _
    %p221 = scmp.le.s32.totalorder 1, %s12
    %p222 = scmp.lt.s32.totalorder %s12, 3
    %p223 = pnand %p221, %p222
    %p224 = pneg %p223
    // Predicated region
    $region33: #{ppm_forward.2} parent=5 // pred_check
      _
    $region34: #{ppm_forward.2} parent=5 // pred_check_branch
      %226 = sbr.rel (%p223) target = $region36
    $region35: #{ppm_forward.2} parent=5 // pred_region
      %s227 = ssub.s32 %s12, 1
      %s228 = smul.u32 2, %s22
      %p229 = scmp.lt.s32.totalorder %s21, 1
      %s230 = scalar_select %p229, %s21, 1
      %p231 = scmp.lt.s32.totalorder %s228, 1
      %s232 = scalar_select %p231, %s228, 1
      %s233 = smul.addr %s230, 2
      %s234 = sadd.s32 %s232, %s233
      %s235 = smul.addr %s234, 8
      %s236 = scalar_lea.vmem %s0, %s235
      %p237 = pneg %p52
      %p238 = pneg %p49
      %s239 = smul.u32 32, %s22
      %p240 = scmp.lt.s32.totalorder %s239, 31
      %s241 = scalar_select %p240, %s239, 31
      %s242 = smul.addr %s241, 4
      %s243 = scalar_lea.vmem %s1, %s242
      %p244 = pneg %p78
      %p245 = pneg %p75
      %p246 = pneg %p99
      %p247 = pneg %p96
      %p248 = pneg %p120
      %p249 = pneg %p117
      %p250 = pneg %p148
      %p251 = pneg %p145
      %s252 = smul.u32 2, %s22
      %p253 = scmp.lt.s32.totalorder %s21, 1
      %s254 = scalar_select %p253, %s21, 1
      %p255 = scmp.lt.s32.totalorder %s252, 1
      %s256 = scalar_select %p255, %s252, 1
      %s257 = smul.addr %s254, 4
      %s258 = sadd.s32 %s256, %s257
      %s259 = smul.addr %s258, 8
      %s260 = scalar_lea.vmem %s4, %s259
      %p261 = pneg %p174
      %p262 = pneg %p171
      %p263 = scmp.lt.s32.totalorder %s21, 1
      %s264 = scalar_select %p263, %s21, 1
      %s265 = smul.addr %s264, 4
      %s266 = scalar_lea.vmem %s5, %s265
      %s267 = smul.u32 2, %s22
      %p268 = scmp.lt.s32.totalorder %s21, 1
      %s269 = scalar_select %p268, %s21, 1
      %p270 = scmp.lt.s32.totalorder %s267, 1
      %s271 = scalar_select %p270, %s267, 1
      %s272 = smul.addr %s269, 2
      %s273 = sadd.s32 %s271, %s272
      %s274 = smul.addr %s273, 8
      %s275 = scalar_lea.vmem %s0, %s274
      %s276 = smul.u32 2, %s22
      %s277 = smul.u32 32, %s22
      %p278 = scmp.lt.s32.totalorder %s277, 31
      %s279 = scalar_select %p278, %s277, 31
      %s280 = smul.addr %s279, 4
      %s281 = scalar_lea.vmem %s1, %s280
      %s282 = smul.u32 32, %s22
      %s283 = smul.u32 2, %s22
      %p284 = scmp.lt.s32.totalorder %s21, 1
      %s285 = scalar_select %p284, %s21, 1
      %p286 = scmp.lt.s32.totalorder %s283, 1
      %s287 = scalar_select %p286, %s283, 1
      %s288 = smul.addr %s285, 4
      %s289 = sadd.s32 %s287, %s288
      %s290 = smul.addr %s289, 8
      %s291 = scalar_lea.vmem %s4, %s290
      %s292 = smul.u32 2, %s22
      %p293 = scmp.lt.s32.totalorder %s21, 1
      %s294 = scalar_select %p293, %s21, 1
      %s295 = smul.addr %s294, 4
      %s296 = scalar_lea.vmem %s5, %s295
      %p298 = scmp.eq.s32.totalorder %s22, 0
      // Predicated region
      $region37: #{ppm_forward.2} parent=35 // pred_check
        %p299 = pneg %p298
      $region38: #{ppm_forward.2} parent=35 // pred_check_branch
        %301 = sbr.rel (%p299) target = $region40
      $region39: #{ppm_forward.2} parent=35 // pred_region
        %302 = vst [vmem:[#allocation2] sm:$0xff] 0.0
      $region40: #{ppm_forward.2} parent=35 // pred_fallthru
        _
      %v303 = vld [vmem:[%s275] sm:$0xff]
      %v304 = vld [vmem:[%s275 + $0x8] sm:$0xff]
      %305 = vst [vmem:[%s291] sm:$0xff] %v303
      %306 = vst [vmem:[%s291 + $0x8] sm:$0xff] %v304
      %v307 = vld [vmem:[%s275] sm:$0xff]
      %v308 = vld [vmem:[%s275 + $0x8] sm:$0xff]
      %v309 = vpack.c.bf16 %v307, %v307
      %v310 = vpack.c.bf16 %v308, %v308
      %v311 = vld [vmem:[#allocation2] sm:$0xff]
      %v312 = vld [vmem:[%s281] sm:$0xf]
      %v313 = vld [vmem:[%s281 + $0x4] sm:$0xf]
      %v314 = vld [vmem:[%s281 + $0x8] sm:$0xf]
      %v315 = vld [vmem:[%s281 + $0xc] sm:$0xf]
      %v316 = vld [vmem:[%s281 + $0x10] sm:$0xf]
      %v317 = vld [vmem:[%s281 + $0x14] sm:$0xf]
      %v318 = vld [vmem:[%s281 + $0x18] sm:$0xf]
      %v319 = vld [vmem:[%s281 + $0x1c] sm:$0xf]
      %v320 = vld [vmem:[%s281 + $0x20] sm:$0xf]
      %v321 = vld [vmem:[%s281 + $0x24] sm:$0xf]
      %v322 = vld [vmem:[%s281 + $0x28] sm:$0xf]
      %v323 = vld [vmem:[%s281 + $0x2c] sm:$0xf]
      %v324 = vld [vmem:[%s281 + $0x30] sm:$0xf]
      %v325 = vld [vmem:[%s281 + $0x34] sm:$0xf]
      %v326 = vld [vmem:[%s281 + $0x38] sm:$0xf]
      %v327 = vld [vmem:[%s281 + $0x3c] sm:$0xf]
      %v328 = vld [vmem:[%s281 + $0x40] sm:$0xf]
      %v329 = vld [vmem:[%s281 + $0x44] sm:$0xf]
      %v330 = vld [vmem:[%s281 + $0x48] sm:$0xf]
      %v331 = vld [vmem:[%s281 + $0x4c] sm:$0xf]
      %v332 = vld [vmem:[%s281 + $0x50] sm:$0xf]
      %v333 = vld [vmem:[%s281 + $0x54] sm:$0xf]
      %v334 = vld [vmem:[%s281 + $0x58] sm:$0xf]
      %v335 = vld [vmem:[%s281 + $0x5c] sm:$0xf]
      %v336 = vld [vmem:[%s281 + $0x60] sm:$0xf]
      %v337 = vld [vmem:[%s281 + $0x64] sm:$0xf]
      %v338 = vld [vmem:[%s281 + $0x68] sm:$0xf]
      %v339 = vld [vmem:[%s281 + $0x6c] sm:$0xf]
      %v340 = vld [vmem:[%s281 + $0x70] sm:$0xf]
      %v341 = vld [vmem:[%s281 + $0x74] sm:$0xf]
      %v342 = vld [vmem:[%s281 + $0x78] sm:$0xf]
      %v343 = vld [vmem:[%s281 + $0x7c] sm:$0xf]
      %v376 = vunpack.c.l.b16 %v312
      %v377 = vunpack.c.l.b16 %v313
      %v378 = vunpack.c.l.b16 %v314
      %v379 = vunpack.c.l.b16 %v315
      %v380 = vunpack.c.l.b16 %v316
      %v381 = vunpack.c.l.b16 %v317
      %v382 = vunpack.c.l.b16 %v318
      %v383 = vunpack.c.l.b16 %v319
      %v384 = vunpack.c.l.b16 %v320
      %v385 = vunpack.c.l.b16 %v321
      %v386 = vunpack.c.l.b16 %v322
      %v387 = vunpack.c.l.b16 %v323
      %v388 = vunpack.c.l.b16 %v324
      %v389 = vunpack.c.l.b16 %v325
      %v390 = vunpack.c.l.b16 %v326
      %v391 = vunpack.c.l.b16 %v327
      %v392 = vunpack.c.l.b16 %v328
      %v393 = vunpack.c.l.b16 %v329
      %v394 = vunpack.c.l.b16 %v330
      %v395 = vunpack.c.l.b16 %v331
      %v396 = vunpack.c.l.b16 %v332
      %v397 = vunpack.c.l.b16 %v333
      %v398 = vunpack.c.l.b16 %v334
      %v399 = vunpack.c.l.b16 %v335
      %v400 = vunpack.c.l.b16 %v336
      %v401 = vunpack.c.l.b16 %v337
      %v402 = vunpack.c.l.b16 %v338
      %v403 = vunpack.c.l.b16 %v339
      %v404 = vunpack.c.l.b16 %v340
      %v405 = vunpack.c.l.b16 %v341
      %v406 = vunpack.c.l.b16 %v342
      %v407 = vunpack.c.l.b16 %v343
      %v408 = vpack.c.b16 %v377, %v376
      %v409 = vpack.c.b16 %v379, %v378
      %v410 = vpack.c.b16 %v381, %v380
      %v411 = vpack.c.b16 %v383, %v382
      %v412 = vpack.c.b16 %v385, %v384
      %v413 = vpack.c.b16 %v387, %v386
      %v414 = vpack.c.b16 %v389, %v388
      %v415 = vpack.c.b16 %v391, %v390
      %v416 = vpack.c.b16 %v393, %v392
      %v417 = vpack.c.b16 %v395, %v394
      %v418 = vpack.c.b16 %v397, %v396
      %v419 = vpack.c.b16 %v399, %v398
      %v420 = vpack.c.b16 %v401, %v400
      %v421 = vpack.c.b16 %v403, %v402
      %v422 = vpack.c.b16 %v405, %v404
      %v423 = vpack.c.b16 %v407, %v406
      %440 = vmatpush.bf16.msra.mxu0 %v415
      %441 = vmatpush.bf16.msra.mxu0 %v414
      %442 = vmatpush.bf16.msra.mxu0 %v413
      %443 = vmatpush.bf16.msra.mxu0 %v412
      %444 = vmatpush.bf16.msra.mxu0 %v411
      %445 = vmatpush.bf16.msra.mxu0 %v410
      %446 = vmatpush.bf16.msra.mxu0 %v409
      %447 = vmatpush.bf16.msra.mxu0 %v408
      %448 = vmatmul.bf16.gmra.mxu0 %v309
      %v449 = vpop.f32.mrf.mxu0
      %v450 = vadd.f32 0.0, %v449
      %v451 = vpop.f32.mrf.mxu0
      %452 = vdwg.mxu0
      %453 = vmatpush.bf16.msra.mxu0 %v423
      %454 = vmatpush.bf16.msra.mxu0 %v422
      %455 = vmatpush.bf16.msra.mxu0 %v421
      %456 = vmatpush.bf16.msra.mxu0 %v420
      %457 = vmatpush.bf16.msra.mxu0 %v419
      %458 = vmatpush.bf16.msra.mxu0 %v418
      %459 = vmatpush.bf16.msra.mxu0 %v417
      %460 = vmatpush.bf16.msra.mxu0 %v416
      %461 = vmatmul.bf16.gmra.mxu0 %v310
      %v462 = vpop.f32.mrf.mxu0
      %v463 = vadd.f32 %v450, %v462
      %v464 = vpop.f32.mrf.mxu0
      %465 = vdwg.mxu0
      %v466 = vadd.f32 %v311, %v463
      %467 = vst [vmem:[#allocation2] sm:$0xff] %v466
      // Predicated region
      $region41: #{ppm_forward.2} parent=35 // pred_check
        %p468 = pneg %p298
      $region42: #{ppm_forward.2} parent=35 // pred_check_branch
        %470 = sbr.rel (%p468) target = $region44
      $region43: #{ppm_forward.2} parent=35 // pred_region
        %v471 = vld [vmem:[%s2] sm:$0xf]
        %v472 = vld [vmem:[#allocation2] sm:$0xff]
        %v473 = vpack.c.bf16 %v472, %v472
        %v474 = vld [vmem:[%s3] sm:$0xff]
        %vm475 = vcmask 64512
        %v477 = vsel %vm475, %v471, 0
        %vm479 = vcmask 1043456
        %v481 = vsel %vm479, %v473, 0
        %483 = vmatpush.bf16.msra.mxu0 0
        %484 = vmatpush.bf16.msra.mxu0 0
        %485 = vmatpush.bf16.msra.mxu0 0
        %486 = vmatpush.bf16.msra.mxu0 0
        %487 = vmatpush.bf16.msra.mxu0 0
        %488 = vmatpush.bf16.msra.mxu0 0
        %489 = vmatpush.bf16.msra.mxu0 0
        %490 = vmatpush.bf16.msra.mxu0 %v481
        %491 = vmatmul.bf16.gmra.mxu0 %v477
        %v492 = vpop.f32.mrf.mxu0
        %v493 = vadd.f32 %v474, %v492
        %v494 = vpop.f32.mrf.mxu0
        %495 = vdwg.mxu0
        %v496 = vmax.f32 %v493, 0.0
        %v497 = vpack.c.bf16 %v496, %v496
        %498 = vst [vmem:[%s296] sm:$0xf] %v497
      $region44: #{ppm_forward.2} parent=35 // pred_fallthru
        _
      %s499 = smul.u32 2, %s22
      %p500 = scmp.lt.s32.totalorder %s21, 1
      %s501 = scalar_select %p500, %s21, 1
      %p502 = scmp.lt.s32.totalorder %s499, 1
      %s503 = scalar_select %p502, %s499, 1
      %s504 = smul.addr %s501, 4
      %s505 = sadd.s32 %s503, %s504
      %s506 = smul.addr %s505, 8
      %s507 = scalar_lea.vmem %s4, %s506
      %p508 = scmp.lt.s32.totalorder %s21, 1
      %s509 = scalar_select %p508, %s21, 1
      %s510 = smul.addr %s509, 4
      %s511 = scalar_lea.vmem %s5, %s510
      // Predicated region
      $region45: #{ppm_forward.2} parent=35 // pred_check
        %p512 = pneg %p145
      $region46: #{ppm_forward.2} parent=35 // pred_check_branch
        %514 = sbr.rel (%p512) target = $region48
      $region47: #{ppm_forward.2} parent=35 // pred_region
        %s515 = smul.u32 2, %s22
      $region48: #{ppm_forward.2} parent=35 // pred_fallthru
        _
      // Predicated region
      $region49: #{ppm_forward.2} parent=35 // pred_check
        %p516 = pneg %p171
      $region50: #{ppm_forward.2} parent=35 // pred_check_branch
        %518 = sbr.rel (%p516) target = $region52
      $region51: #{ppm_forward.2} parent=35 // pred_region
        _
      $region52: #{ppm_forward.2} parent=35 // pred_fallthru
        _
    $region36: #{ppm_forward.2} parent=5 // pred_fallthru
      _
    %p519 = scmp.le.s32.totalorder 2, %s12
    // Predicated region
    $region53: #{ppm_forward.2} parent=5 // pred_check
      %p520 = pneg %p519
    $region54: #{ppm_forward.2} parent=5 // pred_check_branch
      %522 = sbr.rel (%p520) target = $region56
    $region55: #{ppm_forward.2} parent=5 // pred_region
      %s523 = ssub.s32 %s12, 2
      // Predicated region
      $region57: #{ppm_forward.2} parent=55 // pred_check
        %p524 = pneg %p151
      $region58: #{ppm_forward.2} parent=55 // pred_check_branch
        %526 = sbr.rel (%p524) target = $region60
      $region59: #{ppm_forward.2} parent=55 // pred_region
        %s527 = smul.u32 2, %s24
        %p528 = scmp.lt.s32.totalorder %s23, 1
        %s529 = scalar_select %p528, %s23, 1
        %p530 = scmp.lt.s32.totalorder %s527, 1
        %s531 = scalar_select %p530, %s527, 1
        %s532 = smul.addr %s529, 4
        %s533 = sadd.s32 %s531, %s532
        %s534 = smul.addr %s533, 8
        %s535 = scalar_lea.vmem %s4, %s534
      $region60: #{ppm_forward.2} parent=55 // pred_fallthru
        _
      // Predicated region
      $region61: #{ppm_forward.2} parent=55 // pred_check
        %p536 = pneg %p177
      $region62: #{ppm_forward.2} parent=55 // pred_check_branch
        %538 = sbr.rel (%p536) target = $region64
      $region63: #{ppm_forward.2} parent=55 // pred_region
        %p539 = scmp.lt.s32.totalorder %s23, 1
        %s540 = scalar_select %p539, %s23, 1
        %s541 = smul.addr %s540, 4
        %s542 = scalar_lea.vmem %s5, %s541
      $region64: #{ppm_forward.2} parent=55 // pred_fallthru
        _
    $region56: #{ppm_forward.2} parent=5 // pred_fallthru
      _
  $region6: #{ppm_forward.2} parent=0 // loop_footer
    %s16 = sadd.s32 1, %s12
  $region7: #{ppm_forward.2} parent=0 // loop_footer_branch
    %11 = sbr.rel target = $region3
  $region8: #{ppm_forward.2} parent=0 // loop_exit
    _

</llo_original>
